<compile_context>
chip_gen: v6e
topology: v6e:2x2x1
jax: 0.10.0
libtpu: 0.0.40
codegen_flags: <defaults>
</compile_context>

<pallas_src>
import functools

import jax
import jax.numpy as jnp
from jax.experimental import pallas as pl
from jax.experimental.pallas import tpu as pltpu

# Padding logit: with target=0, bce = softplus(-100) underflows so pt == 1 exactly
# in f32 and the focal contribution of padded cells is exactly 0.
_PAD_LOGIT = -100.0


def _round_up(x, m):
    return -(-x // m) * m


def _int_pow(x, n):
    """x ** n for a small non-negative integer n via repeated squaring (VALU only)."""
    if n == 0:
        return jnp.ones_like(x)
    acc = None
    while n:
        if n & 1:
            acc = x if acc is None else acc * x
        n >>= 1
        if n:
            x = x * x
    return acc


def _focal_elementwise(x, t, pw, gamma, alpha):
    # Numerically-stable BCE-with-logits (pos_weight form; pw=None -> standard):
    #   bce = pw * t * softplus(-x) + (1 - t) * softplus(x)
    log_term = jnp.log1p(jnp.exp(-jnp.abs(x)))
    sp_pos = jnp.maximum(x, 0.0) + log_term      # softplus(x)
    sp_neg = sp_pos - x                          # softplus(-x)
    pos_term = t * sp_neg if pw is None else pw * (t * sp_neg)
    bce = pos_term + (1.0 - t) * sp_pos
    one_minus_pt = 1.0 - jnp.exp(-bce)           # 1 - pt
    g = float(gamma)
    if g >= 0.0 and g.is_integer() and g <= 64:
        mod = _int_pow(one_minus_pt, int(g))     # avoid float-exponent pow (EUP log+exp)
    else:
        mod = one_minus_pt ** jnp.float32(gamma)
    focal = mod * bce
    if alpha is not None:
        focal = jnp.float32(alpha) * focal
    return focal


def _focal_partial_kernel(*refs, gamma, alpha, has_pw):
    """Per-grid-step partial sum: writes an (8, Cp) vreg-shaped partial sum."""
    if has_pw:
        logits_ref, targets_ref, pw_ref, out_ref = refs
        pw = pw_ref[...].astype(jnp.float32)
    else:
        logits_ref, targets_ref, out_ref = refs
        pw = None
    x = logits_ref[...].astype(jnp.float32)
    t = targets_ref[...].astype(jnp.float32)
    focal = _focal_elementwise(x, t, pw, gamma, alpha)
    tm, c = focal.shape
    # Sum groups of 8 rows on top of each other: pure vreg adds (VALU), no XLU.
    partial = jnp.sum(focal.reshape(tm // 8, 8, c), axis=0)
    out_ref[...] = partial[None]


def _focal_none_kernel(*refs, gamma, alpha, has_pw):
    if has_pw:
        logits_ref, targets_ref, pw_ref, out_ref = refs
        pw = pw_ref[...].astype(jnp.float32)
    else:
        logits_ref, targets_ref, out_ref = refs
        pw = None
    x = logits_ref[...].astype(jnp.float32)
    t = targets_ref[...].astype(jnp.float32)
    out_ref[...] = _focal_elementwise(x, t, pw, gamma, alpha).astype(out_ref.dtype)


def focal_loss(logits, targets, *, gamma=2.0, alpha=None, reduction='mean',
               pos_weight=None, block_rows=None,
               vmem_budget_bytes=8 * 1024 * 1024):
    """Pallas TPU implementation of FocalLoss.forward.

    reduction: 'mean' | 'sum' | anything else -> unreduced (like the torch module).
    """
    M, C = logits.shape
    has_pw = pos_weight is not None
    is_reduce = reduction in ('mean', 'sum')

    # Pad classes to lane width, batch to the chosen tile height.
    Cp = max(128, _round_up(C, 128))

    # Tile-height selection: keep (inputs [+ output for 'none']) x double-buffer
    # under a conservative VMEM budget (safe on v5e 16 MiB scoped / v7x 64 MiB),
    # capped at 1024 rows (measured roofline plateau for tiled elementwise f32).
    n_streams = 2 if is_reduce else 3
    per_row_bytes = n_streams * 2 * Cp * 4
    if block_rows is None:
        tm = max(8, min(1024, (vmem_budget_bytes // per_row_bytes) // 8 * 8))
    else:
        tm = max(8, (block_rows // 8) * 8)
    tm = min(tm, _round_up(M, 8))
    Mp = _round_up(M, tm)
    grid = (Mp // tm,)

    x, t = logits, targets
    if (Mp, Cp) != (M, C):
        x = jnp.pad(x, ((0, Mp - M), (0, Cp - C)), constant_values=_PAD_LOGIT)
        t = jnp.pad(t, ((0, Mp - M), (0, Cp - C)), constant_values=0)

    in_specs = [
        pl.BlockSpec((tm, Cp), lambda i: (i, 0)),
        pl.BlockSpec((tm, Cp), lambda i: (i, 0)),
    ]
    args = [x, t]
    if has_pw:
        pw = jnp.broadcast_to(jnp.asarray(pos_weight, jnp.float32).reshape(-1), (C,))
        pw = jnp.pad(pw, (0, Cp - C), constant_values=1.0).reshape(1, Cp)
        in_specs.append(pl.BlockSpec((1, Cp), lambda i: (0, 0)))
        args.append(pw)

    if not is_reduce:
        kernel = functools.partial(_focal_none_kernel, gamma=gamma, alpha=alpha,
                                   has_pw=has_pw)
        out = pl.pallas_call(
            kernel,
            out_shape=jax.ShapeDtypeStruct((Mp, Cp), jnp.float32),
            grid_spec=pltpu.PrefetchScalarGridSpec(
                num_scalar_prefetch=0, grid=grid,
                in_specs=in_specs,
                out_specs=pl.BlockSpec((tm, Cp), lambda i: (i, 0))),
            compiler_params=pltpu.CompilerParams(
                dimension_semantics=("parallel",)),
        )(*args)
        return out[:M, :C]

    kernel = functools.partial(_focal_partial_kernel, gamma=gamma, alpha=alpha,
                               has_pw=has_pw)
    partials = pl.pallas_call(
        kernel,
        out_shape=jax.ShapeDtypeStruct((grid[0], 8, Cp), jnp.float32),
        grid_spec=pltpu.PrefetchScalarGridSpec(
            num_scalar_prefetch=0, grid=grid,
            in_specs=in_specs,
            out_specs=pl.BlockSpec((1, 8, Cp), lambda i: (i, 0, 0))),
        compiler_params=pltpu.CompilerParams(
            dimension_semantics=("parallel",)),   # fully parallel -> megacore on v7x
    )(*args)
    total = jnp.sum(partials)                     # tiny final reduction in XLA
    if reduction == 'mean':
        return total / jnp.float32(M * C)
    return total


def _focal_loss_ref(logits, targets, gamma=2.0, alpha=None, reduction='mean',
                    pos_weight=None):
    # Pure-JAX reference replicating F.binary_cross_entropy_with_logits + focal term.
    x = logits.astype(jnp.float32)
    t = targets.astype(jnp.float32)
    if pos_weight is None:
        pw = jnp.ones_like(x)
    else:
        pw = jnp.broadcast_to(jnp.asarray(pos_weight, jnp.float32), x.shape)
    log_term = jnp.log1p(jnp.exp(-jnp.abs(x)))
    sp_pos = jnp.maximum(x, 0.0) + log_term
    sp_neg = sp_pos - x
    bce = pw * t * sp_neg + (1.0 - t) * sp_pos
    pt = jnp.exp(-bce)
    focal = (1.0 - pt) ** gamma * bce
    if alpha is not None:
        focal = alpha * focal
    if reduction == 'mean':
        return focal.mean()
    elif reduction == 'sum':
        return focal.sum()
    return focal


if __name__ == "__main__":
    key = jax.random.PRNGKey(0)
    k1, k2, k3, k4 = jax.random.split(key, 4)

    # Case 1: module defaults (gamma=2, alpha=None, reduction='mean', pos_weight=None)
    N, C = 16, 128
    logits = jax.random.normal(k1, (N, C), jnp.float32) * 2.0
    targets = (jax.random.uniform(k2, (N, C)) > 0.5).astype(jnp.float32)
    loss = jax.block_until_ready(focal_loss(logits, targets))
    ref = _focal_loss_ref(logits, targets)
    assert jnp.allclose(loss, ref, rtol=1e-5, atol=1e-6), (loss, ref)

    # Case 2: non-aligned shapes, 'sum' reduction, pos_weight + alpha
    N2, C2 = 10, 70
    logits2 = jax.random.normal(k3, (N2, C2), jnp.float32) * 3.0
    targets2 = (jax.random.uniform(k4, (N2, C2)) > 0.7).astype(jnp.float32)
    pw2 = jnp.linspace(0.5, 2.0, C2, dtype=jnp.float32)
    loss2 = jax.block_until_ready(
        focal_loss(logits2, targets2, gamma=2.0, alpha=0.25, reduction='sum',
                   pos_weight=pw2))
    ref2 = _focal_loss_ref(logits2, targets2, gamma=2.0, alpha=0.25,
                           reduction='sum', pos_weight=pw2)
    assert jnp.allclose(loss2, ref2, rtol=1e-5, atol=1e-4), (loss2, ref2)

    # Case 3: reduction='none' (unreduced), non-aligned shapes
    out3 = jax.block_until_ready(
        focal_loss(logits2, targets2, gamma=2.0, reduction='none'))
    ref3 = _focal_loss_ref(logits2, targets2, gamma=2.0, reduction='none')
    assert out3.shape == (N2, C2)
    assert jnp.allclose(out3, ref3, rtol=1e-5, atol=1e-6), "none-path mismatch"

    print("KERNEL_OK")
</pallas_src>

<mosaic_0001>
module attributes {stable_mosaic.version = 11 : i64} {
  func.func @_focal_partial_kernel(%arg0: i32, %arg1: memref<16x128xf32, #tpu.memory_space<vmem>>, %arg2: memref<16x128xf32, #tpu.memory_space<vmem>>, %arg3: memref<1x8x128xf32, #tpu.memory_space<vmem>>) attributes {dimension_semantics = [#tpu.dimension_semantics<parallel>], iteration_bounds = array<i64: 1>, scalar_prefetch = 0 : i64, scratch_operands = 0 : i64, tpu.core_type = #tpu.core_type<tc>, window_params = [{transform_indices = @transform_0, window_bounds = array<i64: 16, 128>}, {transform_indices = @transform_1, window_bounds = array<i64: 16, 128>}, {transform_indices = @transform_2, window_bounds = array<i64: 1, 8, 128>}]} {
    %c0 = arith.constant 0 : index
    %c0_0 = arith.constant 0 : index
    %0 = vector.load %arg1[%c0, %c0_0] : memref<16x128xf32, #tpu.memory_space<vmem>>, vector<16x128xf32>
    %c0_1 = arith.constant 0 : index
    %c0_2 = arith.constant 0 : index
    %1 = vector.load %arg2[%c0_1, %c0_2] : memref<16x128xf32, #tpu.memory_space<vmem>>, vector<16x128xf32>
    %2 = math.absf %0 : vector<16x128xf32>
    %cst = arith.constant 0.000000e+00 : f32
    %3 = vector.broadcast %cst : f32 to vector<16x128xf32>
    %4 = arith.subf %3, %2 : vector<16x128xf32>
    %5 = math.exp %4 : vector<16x128xf32>
    %6 = math.log1p %5 : vector<16x128xf32>
    %cst_3 = arith.constant 0.000000e+00 : f32
    %7 = vector.broadcast %cst_3 : f32 to vector<16x128xf32>
    %8 = arith.maximumf %0, %7 : vector<16x128xf32>
    %9 = arith.addf %8, %6 : vector<16x128xf32>
    %10 = arith.subf %9, %0 : vector<16x128xf32>
    %11 = arith.mulf %1, %10 : vector<16x128xf32>
    %cst_4 = arith.constant 1.000000e+00 : f32
    %12 = vector.broadcast %cst_4 : f32 to vector<16x128xf32>
    %13 = arith.subf %12, %1 : vector<16x128xf32>
    %14 = arith.mulf %13, %9 : vector<16x128xf32>
    %15 = arith.addf %11, %14 : vector<16x128xf32>
    %cst_5 = arith.constant 0.000000e+00 : f32
    %16 = vector.broadcast %cst_5 : f32 to vector<16x128xf32>
    %17 = arith.subf %16, %15 : vector<16x128xf32>
    %18 = math.exp %17 : vector<16x128xf32>
    %cst_6 = arith.constant 1.000000e+00 : f32
    %19 = vector.broadcast %cst_6 : f32 to vector<16x128xf32>
    %20 = arith.subf %19, %18 : vector<16x128xf32>
    %21 = arith.mulf %20, %20 : vector<16x128xf32>
    %22 = arith.mulf %21, %15 : vector<16x128xf32>
    %23 = vector.shape_cast %22 : vector<16x128xf32> to vector<2x8x128xf32>
    %cst_7 = arith.constant dense<0.000000e+00> : vector<8x128xf32>
    %24 = vector.multi_reduction <add>, %23, %cst_7 [0] : vector<2x8x128xf32> to vector<8x128xf32>
    %25 = vector.shape_cast %24 : vector<8x128xf32> to vector<1x8x128xf32>
    %c0_8 = arith.constant 0 : index
    %c0_9 = arith.constant 0 : index
    %c0_10 = arith.constant 0 : index
    %26 = vector.load %arg3[%c0_8, %c0_9, %c0_10] : memref<1x8x128xf32, #tpu.memory_space<vmem>>, vector<1x8x128xf32>
    tpu.vector_store %arg3[%c0_8, %c0_9, %c0_10], %25 {strides = array<i32>} : memref<1x8x128xf32, #tpu.memory_space<vmem>>, vector<1x8x128xf32>,
    return
  }
  func.func @transform_0(%arg0: i32) -> (i32, i32) {
    %c0_i32 = arith.constant 0 : i32
    %c0_i32_0 = arith.constant 0 : i32
    return %arg0, %c0_i32 : i32, i32
  }
  func.func @transform_1(%arg0: i32) -> (i32, i32) {
    %c0_i32 = arith.constant 0 : i32
    %c0_i32_0 = arith.constant 0 : i32
    return %arg0, %c0_i32 : i32, i32
  }
  func.func @transform_2(%arg0: i32) -> (i32, i32, i32) {
    %c0_i32 = arith.constant 0 : i32
    %c0_i32_0 = arith.constant 0 : i32
    %c0_i32_1 = arith.constant 0 : i32
    return %arg0, %c0_i32, %c0_i32_0 : i32, i32, i32
  }
}

</mosaic_0001>

<llo_original>
// kernel: tpu_custom_call.1
$region0: #{tpu_custom_call.1}
  #allocation0 [shape = 'u32[]', space=smem, size = 0x4, offset = 0x4, fixed_abs, tag = 'smem constant byte address 0x4 - core index']
  #allocation1 [shape = 'u32[144,128]{1,0:T(1,128)}', space=vmem, size = 0x12000, scoped, tag = 'internal scratch']
  %s0 = inlined_call_operand.hbm [shape: f32[16,128], index: 0, kind: input, shape index: {}]
  %s1 = inlined_call_operand.hbm [shape: f32[16,128], index: 1, kind: input, shape index: {}]
  %s2 = inlined_call_operand.hbm [shape: f32[1,8,128], index: 2, kind: output, shape index: {}]
  %s3 = sld [smem:[#allocation0]]
  $region26: #{tpu_custom_call.1} parent=0
    _
  %s5 = ssub.s32 1, %s3
  %s6 = scalar_select 0, %s5, %s3
  $region1: #{tpu_custom_call.1} parent=0
    #allocation2 [shape = 'u8[8192]{0}', space=vmem, size = 0x2000, scoped, tag = 'input window, operand 0, single buffered']
    #allocation3 [shape = 's32[1]{0}', space=sflag, size = 0x4, scoped, tag = 'scoped memory for tpu_custom_call.1']
    #allocation4 [shape = 's32[1]{0}', space=sflag, size = 0x4, scoped, tag = 'scoped memory for tpu_custom_call.1']
    #allocation5 [shape = 'u8[8192]{0}', space=vmem, size = 0x2000, scoped, tag = 'input window, operand 1, single buffered']
    #allocation6 [shape = 's32[1]{0}', space=sflag, size = 0x4, scoped, tag = 'scoped memory for tpu_custom_call.1']
    #allocation7 [shape = 'u8[4096]{0}', space=vmem, size = 0x1000, scoped, tag = 'output window, operand 0, single buffered']
    %7 = vsyncpa [#allocation3], 0
    %8 = vsyncpa [#allocation6], 0
    %9 = vsyncpa [#allocation4], 0
    // Predicated region
    $region2: #{tpu_custom_call.1} parent=1 // pred_check
      _
    $region3: #{tpu_custom_call.1} parent=1 // pred_check_branch
      %11 = sbr.rel (0) target = $region5
    $region4: #{tpu_custom_call.1} parent=1 // pred_region
      %s13 = ssub.s32 256, 256
      %14 = vsyncadd [#allocation3], %s13
      %s15 = sshll.u32 [#allocation2], 4
      %s16 = int_to_ptr.vmem [resolvable:$true] %s15
      %21 = dma.hbm_to_vmem [thread:$0]  %s0, 256, %s16, [#allocation3], 128, 128, 8
    $region5: #{tpu_custom_call.1} parent=1 // pred_fallthru
      _
    // Predicated region
    $region6: #{tpu_custom_call.1} parent=1 // pred_check
      _
    $region7: #{tpu_custom_call.1} parent=1 // pred_check_branch
      %23 = sbr.rel (0) target = $region9
    $region8: #{tpu_custom_call.1} parent=1 // pred_region
      %s25 = ssub.s32 256, 256
      %26 = vsyncadd [#allocation6], %s25
      %s27 = sshll.u32 [#allocation5], 4
      %s28 = int_to_ptr.vmem [resolvable:$true] %s27
      %33 = dma.hbm_to_vmem [thread:$0]  %s1, 256, %s28, [#allocation6], 128, 128, 8
    $region9: #{tpu_custom_call.1} parent=1 // pred_fallthru
      _
    // Predicated region
    $region10: #{tpu_custom_call.1} parent=1 // pred_check
      _
    $region11: #{tpu_custom_call.1} parent=1 // pred_check_branch
      %35 = sbr.rel (0) target = $region13
    $region12: #{tpu_custom_call.1} parent=1 // pred_region
      %36 = dma.done [#allocation3], 256
    $region13: #{tpu_custom_call.1} parent=1 // pred_fallthru
      _
    // Predicated region
    $region14: #{tpu_custom_call.1} parent=1 // pred_check
      _
    $region15: #{tpu_custom_call.1} parent=1 // pred_check_branch
      %38 = sbr.rel (0) target = $region17
    $region16: #{tpu_custom_call.1} parent=1 // pred_region
      %39 = dma.done [#allocation6], 256
    $region17: #{tpu_custom_call.1} parent=1 // pred_fallthru
      _
    %v40 = vld [vmem:[#allocation2] sm:$0xff]
    %v41 = vld [vmem:[#allocation2 + $0x8] sm:$0xff]
    %v42 = vld [vmem:[#allocation5] sm:$0xff]
    %v43 = vld [vmem:[#allocation5 + $0x8] sm:$0xff]
    %v44 = vand.u32 2147483647, %v40
    %v45 = vand.u32 2147483647, %v41
    %v46 = vsub.f32 0.0, %v44
    %v47 = vsub.f32 0.0, %v45
    %v48 = vmul.f32 %v46, 1.442695
    %v49 = vpow.pop %v48
    %v50 = vmul.f32 %v47, 1.442695
    %v51 = vpow.pop %v50
    %v52 = vadd.f32 %v49, 1.0
    %v53 = vlog2.pop %v52
    %v54 = vmul.f32 %v53, 0.6931472
    %v55 = vmul.f32 -0.5, %v49
    %v56 = vadd.f32 %v55, 1.0
    %v57 = vmul.f32 %v56, %v49
    %v58 = vand.u32 2147483647, %v49
    %vm59 = vcmp.lt.f32.partialorder %v58, 0.0004427343
    %v60 = vsel %vm59, %v57, %v54
    %v61 = vadd.f32 %v51, 1.0
    %v62 = vlog2.pop %v61
    %v63 = vmul.f32 %v62, 0.6931472
    %v64 = vmul.f32 -0.5, %v51
    %v65 = vadd.f32 %v64, 1.0
    %v66 = vmul.f32 %v65, %v51
    %v67 = vand.u32 2147483647, %v51
    %vm68 = vcmp.lt.f32.partialorder %v67, 0.0004427343
    %v69 = vsel %vm68, %v66, %v63
    %v70 = vmax.f32 %v40, 0.0
    %v71 = vmax.f32 %v41, 0.0
    %v72 = vadd.f32 %v70, %v60
    %v73 = vadd.f32 %v71, %v69
    %v74 = vsub.f32 %v72, %v40
    %v75 = vsub.f32 %v73, %v41
    %v76 = vmul.f32 %v42, %v74
    %v77 = vmul.f32 %v43, %v75
    %v78 = vsub.f32 1.0, %v42
    %v79 = vsub.f32 1.0, %v43
    %v80 = vmul.f32 %v78, %v72
    %v81 = vmul.f32 %v79, %v73
    %v82 = vadd.f32 %v76, %v80
    %v83 = vadd.f32 %v77, %v81
    %v84 = vsub.f32 0.0, %v82
    %v85 = vsub.f32 0.0, %v83
    %v86 = vmul.f32 %v84, 1.442695
    %v87 = vpow.pop %v86
    %v88 = vmul.f32 %v85, 1.442695
    %v89 = vpow.pop %v88
    %v90 = vsub.f32 1.0, %v87
    %v91 = vsub.f32 1.0, %v89
    %v92 = vmul.f32 %v90, %v90
    %v93 = vmul.f32 %v91, %v91
    %v94 = vmul.f32 %v92, %v82
    %v95 = vmul.f32 %v93, %v83
    %v96 = vadd.f32 %v94, %v95
    %97 = vst [vmem:[#allocation7] sm:$0xff] %v96
    // Predicated region
    $region18: #{tpu_custom_call.1} parent=1 // pred_check
      _
    $region19: #{tpu_custom_call.1} parent=1 // pred_check_branch
      %99 = sbr.rel (0) target = $region21
    $region20: #{tpu_custom_call.1} parent=1 // pred_region
      %s101 = ssub.s32 128, 128
      %102 = vsyncadd [#allocation4], %s101
      %s104 = sshll.u32 [#allocation7], 4
      %s105 = int_to_ptr.vmem [resolvable:$true] %s104
      %107 = dma.vmem_to_hbm [thread:$0]  %s105, 128, %s2, [#allocation4]
    $region21: #{tpu_custom_call.1} parent=1 // pred_fallthru
      _
    // Predicated region
    $region22: #{tpu_custom_call.1} parent=1 // pred_check
      _
    $region23: #{tpu_custom_call.1} parent=1 // pred_check_branch
      %109 = sbr.rel (0) target = $region25
    $region24: #{tpu_custom_call.1} parent=1 // pred_region
      %110 = dma.done [#allocation4], 128
    $region25: #{tpu_custom_call.1} parent=1 // pred_fallthru
      _
    %111 = vsyncpa [#allocation3], 1
    %112 = vsyncpa [#allocation6], 1
    %113 = vsyncpa [#allocation4], 1

</llo_original>
